<compile_context>
chip_gen: v5e
topology: v5e:2x2
jax: 0.10.0
libtpu: 0.0.40
codegen_flags: <defaults>
</compile_context>

<pallas_src>
import jax
import jax.numpy as jnp
import numpy as np
from jax.experimental import pallas as pl
from jax.experimental.pallas import tpu as pltpu

N_DIGITS = 10
N_FACTS = 2 * N_DIGITS       # 20
NR_CLASSES = 19              # possible sums 0..18
LANE = 128                   # TPU lane width
F_PAD = 2 * LANE             # padded logits width: digit0 @ lane 0, digit1 @ lane 128
W_PAD = LANE                 # worlds dim 100 padded to 128
P1_OFF = 32                  # lane offset of digit-0 probs in the fused output slab
P2_OFF = 64                  # lane offset of digit-1 probs in the fused output slab
EPS = 1e-5
NEG = -1e9                   # padding-lane logit bias -> exp underflows to exactly 0


def _constants():
    """Constant matrices (baked once, passed as resident VMEM inputs).

    ee   (256,256): block-diagonal expansion. Top-left block maps digit-0 lane i
                    to world lanes i*10+j; bottom-right maps digit-1 lane j to the
                    same world lanes. One (tb,256)@(256,256) MXU pass computes both
                    expansions; worlds = pe[:, :128] * pe[:, 128:].
    hb   (128,128): padded herbrand base, hb[i*10+j, i+j] = 1 (query in lanes 0..18).
    plc  (256,128): placement matrix moving the normalized fact probs into the
                    fused output slab (digit0 -> lanes 32..41, digit1 -> 64..73).
    eps  (1,128)  : EPS on the 10 real lanes, 0 on padding lanes.
    """
    ee = np.zeros((F_PAD, F_PAD), np.float32)
    hb = np.zeros((W_PAD, LANE), np.float32)
    plc = np.zeros((F_PAD, LANE), np.float32)
    for i in range(N_DIGITS):
        for j in range(N_DIGITS):
            w = i * N_DIGITS + j
            ee[i, w] = 1.0                    # digit-0 expansion (top-left block)
            ee[LANE + j, LANE + w] = 1.0      # digit-1 expansion (bottom-right block)
            hb[w, i + j] = 1.0
    for i in range(N_DIGITS):
        plc[i, P1_OFF + i] = 1.0
        plc[LANE + i, P2_OFF + i] = 1.0
    eps = np.zeros((1, LANE), np.float32)
    eps[0, :N_DIGITS] = EPS
    return ee, hb, plc, eps


def deepproblog_kernel(x_ref, w1_ref, b1_ref, w2_ref, b2_ref,
                       ee_ref, hb_ref, plc_ref, eps_ref, out_ref):
    """Fused: MLP encoder -> concept normalization -> ProbLog worlds/query.

    x_ref  : (TB, Dp)        flattened image tile (D zero-padded to lane multiple)
    w1_ref : (Dp, Hp)        encoder layer 1 (hidden padded to 128 multiple)
    b1_ref : (1, Hp)
    w2_ref : (Hp, 256)       encoder layer 2; digit0 logits in lanes 0..9,
                             digit1 logits in lanes 128..137, rest zero
    b2_ref : (1, 256)        padding lanes = -1e9 (softmax weight exactly 0)
    ee_ref : (256, 256)      block-diagonal expansion matrices (digit0 | digit1)
    hb_ref : (128, 128)      padded herbrand base, query in lanes 0..18
    plc_ref: (256, 128)      fact-prob placement matrix (-> lanes 32..41 / 64..73)
    eps_ref: (1, 128)        eps on the 10 real lanes only
    out_ref: (TB, 128)       fused output slab: q @ 0..18, p1 @ 32..41, p2 @ 64..73
    """
    # --- encoder: two MXU matmuls (K / N padded to lane multiples, exact math) ---
    h = jnp.dot(x_ref[...], w1_ref[...], preferred_element_type=jnp.float32)
    h = jnp.maximum(h + b1_ref[...], 0.0)
    z = jnp.dot(h, w2_ref[...], preferred_element_type=jnp.float32) + b2_ref[...]

    # --- normalize_concepts: per-digit softmax + eps renorm on lane-aligned halves ---
    def _norm(zl):
        m = jnp.max(zl, axis=-1, keepdims=True)
        e = jnp.exp(zl - m)                       # padding lanes: exp(-1e9 - m) == 0
        p = e * pl.reciprocal(jnp.sum(e, axis=-1, keepdims=True), approx=False)
        p = p + eps_ref[...]                      # eps only on the 10 real lanes
        return p * pl.reciprocal(jnp.sum(p, axis=-1, keepdims=True), approx=False)

    p1 = _norm(z[:, :LANE])      # (TB, 128), digit-0 probs in lanes 0..9, zeros elsewhere
    p2 = _norm(z[:, LANE:])      # (TB, 128), digit-1 probs in lanes 0..9, zeros elsewhere
    pcat = jnp.concatenate([p1, p2], axis=-1)     # (TB, 256), lane-aligned concat

    # --- problog_inference (addition task): worlds + herbrand, all on the MXU ---
    # Fused expansion: one (TB,256)@(256,256) pass computes both digit expansions.
    pe = jnp.dot(pcat, ee_ref[...], preferred_element_type=jnp.float32)   # (TB, 256)
    worlds = pe[:, :W_PAD] * pe[:, W_PAD:]                                # (TB, 128)
    q = jnp.dot(worlds, hb_ref[...], preferred_element_type=jnp.float32)  # (TB, 128)
    # Place the normalized fact probs into the same slab (disjoint lanes, exact copy).
    f_placed = jnp.dot(pcat, plc_ref[...], preferred_element_type=jnp.float32)
    out_ref[...] = q + f_placed


def _round_up(x, m):
    return ((x + m - 1) // m) * m


def deepproblog_forward(x_nchw, params, *, batch_tile=512):
    """Runs the fused Pallas kernel. Returns (query_prob, facts_probs)."""
    w1, b1, w2, b2 = params
    B = x_nchw.shape[0]
    x_flat = x_nchw.reshape(B, -1).astype(jnp.float32)
    D = x_flat.shape[1]
    hid = w1.shape[1]
    d_pad = max(LANE, _round_up(D, LANE))
    hid_pad = max(LANE, _round_up(hid, LANE))

    # --- pad x columns and encoder weights to lane-aligned shapes (zero-pad => identical math) ---
    if d_pad != D:
        x_flat = jnp.zeros((B, d_pad), jnp.float32).at[:, :D].set(x_flat)
    w1_p = jnp.zeros((d_pad, hid_pad), jnp.float32).at[:D, :hid].set(w1.astype(jnp.float32))
    b1_p = jnp.zeros((1, hid_pad), jnp.float32).at[:, :hid].set(
        jnp.reshape(b1, (-1,)).astype(jnp.float32))
    w2f = w2.astype(jnp.float32)
    b2f = jnp.reshape(b2, (-1,)).astype(jnp.float32)
    w2_p = (jnp.zeros((hid_pad, F_PAD), jnp.float32)
            .at[:hid, :N_DIGITS].set(w2f[:, :N_DIGITS])
            .at[:hid, LANE:LANE + N_DIGITS].set(w2f[:, N_DIGITS:]))
    b2_p = (jnp.full((1, F_PAD), NEG, jnp.float32)
            .at[0, :N_DIGITS].set(b2f[:N_DIGITS])
            .at[0, LANE:LANE + N_DIGITS].set(b2f[N_DIGITS:]))

    ee_np, hb_np, plc_np, eps_np = _constants()
    ee = jnp.asarray(ee_np)
    hb = jnp.asarray(hb_np)
    plc = jnp.asarray(plc_np)
    eps = jnp.asarray(eps_np)

    # --- batch tiling: pipelined x tiles, weights/constants resident in VMEM.
    # Always produce >=2 grid steps so v7x's two TensorCores both get work.
    if B >= 2 * batch_tile:
        tb = batch_tile
    else:
        tb = max(8, _round_up((B + 1) // 2, 8))
    b_pad = _round_up(B, tb)
    if b_pad // tb < 2:
        b_pad = 2 * tb                      # padded rows compute garbage, sliced off below
    if b_pad != B:
        x_flat = jnp.zeros((b_pad, d_pad), jnp.float32).at[:B].set(x_flat)
    grid = (b_pad // tb,)

    def row_spec(shape):
        return pl.BlockSpec(shape, lambda i: (i, 0))

    def const_spec(shape):
        return pl.BlockSpec(shape, lambda i: (0, 0))

    flops = 2 * b_pad * (d_pad * hid_pad + hid_pad * F_PAD
                         + F_PAD * F_PAD + W_PAD * LANE + F_PAD * LANE)
    bytes_accessed = 4 * (b_pad * d_pad + d_pad * hid_pad + hid_pad * F_PAD
                          + F_PAD * F_PAD + W_PAD * LANE + F_PAD * LANE
                          + b_pad * LANE)

    # Double-buffered x / out tiles plus resident weights, constants and live
    # intermediates; 2x margin, capped below v7x's 64 MiB physical VMEM.
    vmem_need = 4 * (2 * tb * d_pad + 2 * tb * LANE
                     + d_pad * hid_pad + hid_pad
                     + hid_pad * F_PAD + F_PAD
                     + F_PAD * F_PAD + W_PAD * LANE + F_PAD * LANE + LANE
                     + tb * (hid_pad + 4 * F_PAD))
    vmem_limit = int(min(56 * 2 ** 20, max(32 * 2 ** 20, 2 * vmem_need)))

    # TODO(synk): if profiling on v5e shows the x DMA exposed at large D, add
    # pipeline_mode=pl.Buffered(3) on the x BlockSpec only.
    out_pad = pl.pallas_call(
        deepproblog_kernel,
        out_shape=jax.ShapeDtypeStruct((b_pad, LANE), jnp.float32),
        grid=grid,
        in_specs=[
            row_spec((tb, d_pad)),           # x tile (pipelined over batch)
            const_spec((d_pad, hid_pad)),    # w1 (resident)
            const_spec((1, hid_pad)),        # b1
            const_spec((hid_pad, F_PAD)),    # w2 (lane-aligned per-digit layout)
            const_spec((1, F_PAD)),          # b2 (padding lanes = -1e9)
            const_spec((F_PAD, F_PAD)),      # fused block-diagonal expansion
            const_spec((W_PAD, LANE)),       # herbrand base (worlds padded to 128)
            const_spec((F_PAD, LANE)),       # fact-prob placement matrix
            const_spec((1, LANE)),           # eps vector
        ],
        out_specs=row_spec((tb, LANE)),      # single lane-dense output slab
        compiler_params=pltpu.CompilerParams(
            dimension_semantics=("parallel",),
            vmem_limit_bytes=vmem_limit),
        cost_estimate=pl.CostEstimate(flops=flops,
                                      transcendentals=b_pad * F_PAD,
                                      bytes_accessed=bytes_accessed),
    )(x_flat, w1_p, b1_p, w2_p, b2_p, ee, hb, plc, eps)

    query = out_pad[:B, :NR_CLASSES]
    facts = jnp.stack([out_pad[:B, P1_OFF:P1_OFF + N_DIGITS],
                       out_pad[:B, P2_OFF:P2_OFF + N_DIGITS]], axis=1)
    return query, facts


def reference_forward(x_nchw, params):
    """Pure-JAX reference of the same semantics (for correctness check)."""
    w1, b1, w2, b2 = params
    B = x_nchw.shape[0]
    x_flat = x_nchw.reshape(B, -1).astype(jnp.float32)
    h = jnp.maximum(x_flat @ w1 + b1, 0.0)
    z = h @ w2 + b2
    p1 = jax.nn.softmax(z[:, :N_DIGITS], axis=-1) + EPS
    p1 = p1 / jnp.sum(p1, axis=-1, keepdims=True)
    p2 = jax.nn.softmax(z[:, N_DIGITS:], axis=-1) + EPS
    p2 = p2 / jnp.sum(p2, axis=-1, keepdims=True)
    worlds = (p1[:, :, None] * p2[:, None, :]).reshape(B, N_DIGITS * N_DIGITS)
    hb = np.zeros((N_DIGITS * N_DIGITS, NR_CLASSES), dtype=np.float32)
    for i in range(N_DIGITS):
        for j in range(N_DIGITS):
            hb[i * N_DIGITS + j, i + j] = 1.0
    query = worlds @ jnp.asarray(hb)
    facts = jnp.stack([p1, p2], axis=1)
    return query, facts


# TODO(synk): the real problog_inference evaluates compiled SDD circuits
# (model_dict['query'][labels].evaluate(semiring=...)); here it is replaced by
# the equivalent exhaustive-worlds herbrand matmul for the addition task.

if __name__ == "__main__":
    key = jax.random.PRNGKey(0)
    kx, k1, k2, k3, k4 = jax.random.split(key, 5)

    B, C, H, W = 8, 1, 16, 16       # small NCHW input
    D = C * H * W
    HID = 32

    x = jax.random.normal(kx, (B, C, H, W), dtype=jnp.float32)
    w1 = jax.random.normal(k1, (D, HID), dtype=jnp.float32) * 0.05
    b1 = jax.random.normal(k2, (1, HID), dtype=jnp.float32) * 0.01
    w2 = jax.random.normal(k3, (HID, N_FACTS), dtype=jnp.float32) * 0.1
    b2 = jax.random.normal(k4, (1, N_FACTS), dtype=jnp.float32) * 0.01
    params = (w1, b1, w2, b2)

    query_prob, facts_probs = deepproblog_forward(x, params)
    jax.block_until_ready((query_prob, facts_probs))

    q_ref, f_ref = reference_forward(x, params)
    assert query_prob.shape == (B, NR_CLASSES)
    assert facts_probs.shape == (B, 2, N_DIGITS)
    np.testing.assert_allclose(np.asarray(query_prob), np.asarray(q_ref),
                               rtol=1e-5, atol=1e-5)
    np.testing.assert_allclose(np.asarray(facts_probs), np.asarray(f_ref),
                               rtol=1e-5, atol=1e-5)
    # query probabilities over 19 sums must sum to ~1
    np.testing.assert_allclose(np.asarray(query_prob).sum(-1),
                               np.ones(B), rtol=1e-4, atol=1e-4)

    print("KERNEL_OK")
</pallas_src>

<mosaic_0001>
module attributes {stable_mosaic.version = 11 : i64} {
  func.func @deepproblog_kernel(%arg0: i32, %arg1: memref<8x256xf32, #tpu.memory_space<vmem>>, %arg2: memref<256x128xf32, #tpu.memory_space<vmem>>, %arg3: memref<1x128xf32, #tpu.memory_space<vmem>>, %arg4: memref<128x256xf32, #tpu.memory_space<vmem>>, %arg5: memref<1x256xf32, #tpu.memory_space<vmem>>, %arg6: memref<256x256xf32, #tpu.memory_space<vmem>>, %arg7: memref<128x128xf32, #tpu.memory_space<vmem>>, %arg8: memref<256x128xf32, #tpu.memory_space<vmem>>, %arg9: memref<1x128xf32, #tpu.memory_space<vmem>>, %arg10: memref<8x128xf32, #tpu.memory_space<vmem>>) attributes {dimension_semantics = [#tpu.dimension_semantics<parallel>], iteration_bounds = array<i64: 2>, scalar_prefetch = 0 : i64, scratch_operands = 0 : i64, tpu.core_type = #tpu.core_type<tc>, window_params = [{transform_indices = @transform_0, window_bounds = array<i64: 8, 256>}, {pipeline_mode = #tpu.pipeline_mode<synchronous>, transform_indices = @transform_1, window_bounds = array<i64: 256, 128>}, {pipeline_mode = #tpu.pipeline_mode<synchronous>, transform_indices = @transform_2, window_bounds = array<i64: 1, 128>}, {pipeline_mode = #tpu.pipeline_mode<synchronous>, transform_indices = @transform_3, window_bounds = array<i64: 128, 256>}, {pipeline_mode = #tpu.pipeline_mode<synchronous>, transform_indices = @transform_4, window_bounds = array<i64: 1, 256>}, {pipeline_mode = #tpu.pipeline_mode<synchronous>, transform_indices = @transform_5, window_bounds = array<i64: 256, 256>}, {pipeline_mode = #tpu.pipeline_mode<synchronous>, transform_indices = @transform_6, window_bounds = array<i64: 128, 128>}, {pipeline_mode = #tpu.pipeline_mode<synchronous>, transform_indices = @transform_7, window_bounds = array<i64: 256, 128>}, {pipeline_mode = #tpu.pipeline_mode<synchronous>, transform_indices = @transform_8, window_bounds = array<i64: 1, 128>}, {transform_indices = @transform_9, window_bounds = array<i64: 8, 128>}]} {
    %c0 = arith.constant 0 : index
    %c0_0 = arith.constant 0 : index
    %0 = vector.load %arg1[%c0, %c0_0] : memref<8x256xf32, #tpu.memory_space<vmem>>, vector<8x256xf32>
    %c0_1 = arith.constant 0 : index
    %c0_2 = arith.constant 0 : index
    %1 = vector.load %arg2[%c0_1, %c0_2] : memref<256x128xf32, #tpu.memory_space<vmem>>, vector<256x128xf32>
    %cst = arith.constant dense<0.000000e+00> : vector<8x128xf32>
    %2 = tpu.matmul %0, %1, %cst {dimension_numbers = #tpu.dot_dimension_numbers<[1], [0], [0], [1], [0, 0, 1, 1], [], []>} : vector<8x256xf32>, vector<256x128xf32>, vector<8x128xf32> -> vector<8x128xf32>
    %c0_3 = arith.constant 0 : index
    %c0_4 = arith.constant 0 : index
    %3 = vector.load %arg3[%c0_3, %c0_4] : memref<1x128xf32, #tpu.memory_space<vmem>>, vector<1x128xf32>
    %4 = vector.broadcast %3 : vector<1x128xf32> to vector<8x128xf32>
    %5 = arith.addf %2, %4 : vector<8x128xf32>
    %cst_5 = arith.constant 0.000000e+00 : f32
    %6 = vector.broadcast %cst_5 : f32 to vector<8x128xf32>
    %7 = arith.maximumf %5, %6 : vector<8x128xf32>
    %c0_6 = arith.constant 0 : index
    %c0_7 = arith.constant 0 : index
    %8 = vector.load %arg4[%c0_6, %c0_7] : memref<128x256xf32, #tpu.memory_space<vmem>>, vector<128x256xf32>
    %cst_8 = arith.constant dense<0.000000e+00> : vector<8x256xf32>
    %9 = tpu.matmul %7, %8, %cst_8 {dimension_numbers = #tpu.dot_dimension_numbers<[1], [0], [0], [1], [0, 0, 1, 1], [], []>} : vector<8x128xf32>, vector<128x256xf32>, vector<8x256xf32> -> vector<8x256xf32>
    %c0_9 = arith.constant 0 : index
    %c0_10 = arith.constant 0 : index
    %10 = vector.load %arg5[%c0_9, %c0_10] : memref<1x256xf32, #tpu.memory_space<vmem>>, vector<1x256xf32>
    %11 = vector.broadcast %10 : vector<1x256xf32> to vector<8x256xf32>
    %12 = arith.addf %9, %11 : vector<8x256xf32>
    %13 = vector.extract_strided_slice %12 {offsets = [0, 0], sizes = [8, 128], strides = [1, 1]} : vector<8x256xf32> to vector<8x128xf32>
    %cst_11 = arith.constant dense<0xFF800000> : vector<8xf32>
    %14 = vector.multi_reduction <maximumf>, %13, %cst_11 [1] : vector<8x128xf32> to vector<8xf32>
    %15 = vector.shape_cast %14 : vector<8xf32> to vector<8x1xf32>
    %16 = vector.broadcast %15 : vector<8x1xf32> to vector<8x128xf32>
    %17 = arith.subf %13, %16 : vector<8x128xf32>
    %18 = math.exp %17 : vector<8x128xf32>
    %cst_12 = arith.constant dense<0.000000e+00> : vector<8xf32>
    %19 = vector.multi_reduction <add>, %18, %cst_12 [1] : vector<8x128xf32> to vector<8xf32>
    %20 = vector.shape_cast %19 : vector<8xf32> to vector<8x1xf32>
    %21 = tpu.reciprocal %20 : vector<8x1xf32> -> vector<8x1xf32>
    %22 = vector.broadcast %21 : vector<8x1xf32> to vector<8x128xf32>
    %23 = arith.mulf %18, %22 : vector<8x128xf32>
    %c0_13 = arith.constant 0 : index
    %c0_14 = arith.constant 0 : index
    %24 = vector.load %arg9[%c0_13, %c0_14] : memref<1x128xf32, #tpu.memory_space<vmem>>, vector<1x128xf32>
    %25 = vector.broadcast %24 : vector<1x128xf32> to vector<8x128xf32>
    %26 = arith.addf %23, %25 : vector<8x128xf32>
    %cst_15 = arith.constant dense<0.000000e+00> : vector<8xf32>
    %27 = vector.multi_reduction <add>, %26, %cst_15 [1] : vector<8x128xf32> to vector<8xf32>
    %28 = vector.shape_cast %27 : vector<8xf32> to vector<8x1xf32>
    %29 = tpu.reciprocal %28 : vector<8x1xf32> -> vector<8x1xf32>
    %30 = vector.broadcast %29 : vector<8x1xf32> to vector<8x128xf32>
    %31 = arith.mulf %26, %30 : vector<8x128xf32>
    %32 = vector.extract_strided_slice %12 {offsets = [0, 128], sizes = [8, 128], strides = [1, 1]} : vector<8x256xf32> to vector<8x128xf32>
    %cst_16 = arith.constant dense<0xFF800000> : vector<8xf32>
    %33 = vector.multi_reduction <maximumf>, %32, %cst_16 [1] : vector<8x128xf32> to vector<8xf32>
    %34 = vector.shape_cast %33 : vector<8xf32> to vector<8x1xf32>
    %35 = vector.broadcast %34 : vector<8x1xf32> to vector<8x128xf32>
    %36 = arith.subf %32, %35 : vector<8x128xf32>
    %37 = math.exp %36 : vector<8x128xf32>
    %cst_17 = arith.constant dense<0.000000e+00> : vector<8xf32>
    %38 = vector.multi_reduction <add>, %37, %cst_17 [1] : vector<8x128xf32> to vector<8xf32>
    %39 = vector.shape_cast %38 : vector<8xf32> to vector<8x1xf32>
    %40 = tpu.reciprocal %39 : vector<8x1xf32> -> vector<8x1xf32>
    %41 = vector.broadcast %40 : vector<8x1xf32> to vector<8x128xf32>
    %42 = arith.mulf %37, %41 : vector<8x128xf32>
    %c0_18 = arith.constant 0 : index
    %c0_19 = arith.constant 0 : index
    %43 = vector.load %arg9[%c0_18, %c0_19] : memref<1x128xf32, #tpu.memory_space<vmem>>, vector<1x128xf32>
    %44 = vector.broadcast %43 : vector<1x128xf32> to vector<8x128xf32>
    %45 = arith.addf %42, %44 : vector<8x128xf32>
    %cst_20 = arith.constant dense<0.000000e+00> : vector<8xf32>
    %46 = vector.multi_reduction <add>, %45, %cst_20 [1] : vector<8x128xf32> to vector<8xf32>
    %47 = vector.shape_cast %46 : vector<8xf32> to vector<8x1xf32>
    %48 = tpu.reciprocal %47 : vector<8x1xf32> -> vector<8x1xf32>
    %49 = vector.broadcast %48 : vector<8x1xf32> to vector<8x128xf32>
    %50 = arith.mulf %45, %49 : vector<8x128xf32>
    %51 = tpu.concatenate %31, %50 in 1 : vector<8x128xf32>, vector<8x128xf32> -> vector<8x256xf32>
    %c0_21 = arith.constant 0 : index
    %c0_22 = arith.constant 0 : index
    %52 = vector.load %arg6[%c0_21, %c0_22] : memref<256x256xf32, #tpu.memory_space<vmem>>, vector<256x256xf32>
    %cst_23 = arith.constant dense<0.000000e+00> : vector<8x256xf32>
    %53 = tpu.matmul %51, %52, %cst_23 {dimension_numbers = #tpu.dot_dimension_numbers<[1], [0], [0], [1], [0, 0, 1, 1], [], []>} : vector<8x256xf32>, vector<256x256xf32>, vector<8x256xf32> -> vector<8x256xf32>
    %54 = vector.extract_strided_slice %53 {offsets = [0, 0], sizes = [8, 128], strides = [1, 1]} : vector<8x256xf32> to vector<8x128xf32>
    %55 = vector.extract_strided_slice %53 {offsets = [0, 128], sizes = [8, 128], strides = [1, 1]} : vector<8x256xf32> to vector<8x128xf32>
    %56 = arith.mulf %54, %55 : vector<8x128xf32>
    %c0_24 = arith.constant 0 : index
    %c0_25 = arith.constant 0 : index
    %57 = vector.load %arg7[%c0_24, %c0_25] : memref<128x128xf32, #tpu.memory_space<vmem>>, vector<128x128xf32>
    %cst_26 = arith.constant dense<0.000000e+00> : vector<8x128xf32>
    %58 = tpu.matmul %56, %57, %cst_26 {dimension_numbers = #tpu.dot_dimension_numbers<[1], [0], [0], [1], [0, 0, 1, 1], [], []>} : vector<8x128xf32>, vector<128x128xf32>, vector<8x128xf32> -> vector<8x128xf32>
    %c0_27 = arith.constant 0 : index
    %c0_28 = arith.constant 0 : index
    %59 = vector.load %arg8[%c0_27, %c0_28] : memref<256x128xf32, #tpu.memory_space<vmem>>, vector<256x128xf32>
    %cst_29 = arith.constant dense<0.000000e+00> : vector<8x128xf32>
    %60 = tpu.matmul %51, %59, %cst_29 {dimension_numbers = #tpu.dot_dimension_numbers<[1], [0], [0], [1], [0, 0, 1, 1], [], []>} : vector<8x256xf32>, vector<256x128xf32>, vector<8x128xf32> -> vector<8x128xf32>
    %61 = arith.addf %58, %60 : vector<8x128xf32>
    %c0_30 = arith.constant 0 : index
    %c0_31 = arith.constant 0 : index
    %62 = vector.load %arg10[%c0_30, %c0_31] : memref<8x128xf32, #tpu.memory_space<vmem>>, vector<8x128xf32>
    tpu.vector_store %arg10[%c0_30, %c0_31], %61 {strides = array<i32>} : memref<8x128xf32, #tpu.memory_space<vmem>>, vector<8x128xf32>,
    return
  }
  func.func @transform_0(%arg0: i32) -> (i32, i32) {
    %c0_i32 = arith.constant 0 : i32
    %c0_i32_0 = arith.constant 0 : i32
    return %arg0, %c0_i32 : i32, i32
  }
  func.func @transform_1(%arg0: i32) -> (i32, i32) {
    %c0_i32 = arith.constant 0 : i32
    %c0_i32_0 = arith.constant 0 : i32
    %c0_i32_1 = arith.constant 0 : i32
    return %c0_i32, %c0_i32_0 : i32, i32
  }
  func.func @transform_2(%arg0: i32) -> (i32, i32) {
    %c0_i32 = arith.constant 0 : i32
    %c0_i32_0 = arith.constant 0 : i32
    %c0_i32_1 = arith.constant 0 : i32
    return %c0_i32, %c0_i32_0 : i32, i32
  }
  func.func @transform_3(%arg0: i32) -> (i32, i32) {
    %c0_i32 = arith.constant 0 : i32
    %c0_i32_0 = arith.constant 0 : i32
    %c0_i32_1 = arith.constant 0 : i32
    return %c0_i32, %c0_i32_0 : i32, i32
  }
  func.func @transform_4(%arg0: i32) -> (i32, i32) {
    %c0_i32 = arith.constant 0 : i32
    %c0_i32_0 = arith.constant 0 : i32
    %c0_i32_1 = arith.constant 0 : i32
    return %c0_i32, %c0_i32_0 : i32, i32
  }
  func.func @transform_5(%arg0: i32) -> (i32, i32) {
    %c0_i32 = arith.constant 0 : i32
    %c0_i32_0 = arith.constant 0 : i32
    %c0_i32_1 = arith.constant 0 : i32
    return %c0_i32, %c0_i32_0 : i32, i32
  }
  func.func @transform_6(%arg0: i32) -> (i32, i32) {
    %c0_i32 = arith.constant 0 : i32
    %c0_i32_0 = arith.constant 0 : i32
    %c0_i32_1 = arith.constant 0 : i32
    return %c0_i32, %c0_i32_0 : i32, i32
  }
  func.func @transform_7(%arg0: i32) -> (i32, i32) {
    %c0_i32 = arith.constant 0 : i32
    %c0_i32_0 = arith.constant 0 : i32
    %c0_i32_1 = arith.constant 0 : i32
    return %c0_i32, %c0_i32_0 : i32, i32
  }
  func.func @transform_8(%arg0: i32) -> (i32, i32) {
    %c0_i32 = arith.constant 0 : i32
    %c0_i32_0 = arith.constant 0 : i32
    %c0_i32_1 = arith.constant 0 : i32
    return %c0_i32, %c0_i32_0 : i32, i32
  }
  func.func @transform_9(%arg0: i32) -> (i32, i32) {
    %c0_i32 = arith.constant 0 : i32
    %c0_i32_0 = arith.constant 0 : i32
    return %arg0, %c0_i32 : i32, i32
  }
}

</mosaic_0001>

<llo_original>
// kernel: tpu_custom_call.1
$region0: #{tpu_custom_call.1}
  #allocation0 [shape = 'u32[]', space=smem, size = 0x4, offset = 0x4, fixed_abs, tag = 'smem constant byte address 0x4 - core index']
  #allocation1 [shape = 'u32[72,128]{1,0:T(1,128)}', space=vmem, size = 0x9000, scoped, tag = 'internal scratch']
  %s0 = inlined_call_operand.hbm [shape: f32[16,256], index: 0, kind: input, shape index: {}]
  %s1 = inlined_call_operand.hbm [shape: f32[256,128], index: 1, kind: input, shape index: {}]
  %s2 = inlined_call_operand.vmem [shape: f32[1,128], index: 2, kind: input, shape index: {}]
  %s3 = inlined_call_operand.hbm [shape: f32[128,256], index: 3, kind: input, shape index: {}]
  %s4 = inlined_call_operand.vmem [shape: f32[1,256], index: 4, kind: input, shape index: {}]
  %s5 = inlined_call_operand.hbm [shape: f32[256,256], index: 5, kind: input, shape index: {}]
  %s6 = inlined_call_operand.hbm [shape: f32[128,128], index: 6, kind: input, shape index: {}]
  %s7 = inlined_call_operand.hbm [shape: f32[256,128], index: 7, kind: input, shape index: {}]
  %s8 = inlined_call_operand.vmem [shape: f32[1,128], index: 8, kind: input, shape index: {}]
  %s9 = inlined_call_operand.hbm [shape: f32[16,128], index: 9, kind: output, shape index: {}]
  %s10 = sld [smem:[#allocation0]]
  $region93: #{tpu_custom_call.1} parent=0
    _
  %s12 = ssub.s32 1, %s10
  %s13 = scalar_select 0, %s12, %s10
  $region1: #{tpu_custom_call.1} parent=0
    #allocation2 [shape = 'u8[16384]{0}', space=vmem, size = 0x4000, scoped, tag = 'input window, operand 0']
    #allocation3 [shape = 's32[2]{0}', space=sflag, size = 0x8, scoped, tag = 'scoped memory for tpu_custom_call.1']
    #allocation4 [shape = 's32[2]{0}', space=sflag, size = 0x8, scoped, tag = 'scoped memory for tpu_custom_call.1']
    #allocation5 [shape = 'u8[131072]{0}', space=vmem, size = 0x20000, scoped, tag = 'input window, operand 1, single buffered']
    #allocation6 [shape = 's32[1]{0}', space=sflag, size = 0x4, scoped, tag = 'scoped memory for tpu_custom_call.1']
    #allocation7 [shape = 'u8[131072]{0}', space=vmem, size = 0x20000, scoped, tag = 'input window, operand 3, single buffered']
    #allocation8 [shape = 'u8[262144]{0}', space=vmem, size = 0x40000, scoped, tag = 'input window, operand 5, single buffered']
    #allocation9 [shape = 's32[1]{0}', space=sflag, size = 0x4, scoped, tag = 'scoped memory for tpu_custom_call.1']
    #allocation10 [shape = 'u8[65536]{0}', space=vmem, size = 0x10000, scoped, tag = 'input window, operand 6, single buffered']
    #allocation11 [shape = 'u8[131072]{0}', space=vmem, size = 0x20000, scoped, tag = 'input window, operand 7, single buffered']
    #allocation12 [shape = 's32[1]{0}', space=sflag, size = 0x4, scoped, tag = 'scoped memory for tpu_custom_call.1']
    #allocation13 [shape = 'u8[8192]{0}', space=vmem, size = 0x2000, scoped, tag = 'output window, operand 0']
    %14 = vsyncpa [#allocation3], 0
    %s15 = scalar_lea.sflag [#allocation3], 1
    %16 = vsyncpa %s15, 0
    %17 = vsyncpa [#allocation6], 0
    %18 = vsyncpa [#allocation9], 0
    %19 = vsyncpa [#allocation12], 0
    %20 = vsyncpa [#allocation4], 0
    %s21 = scalar_lea.sflag [#allocation4], 1
    %22 = vsyncpa %s21, 0
    loop: start=0, step=1, limit=4
    $region2: #{tpu_custom_call.1} parent=1 // loop_pre_header
      _
    $region3: #{tpu_custom_call.1} parent=1 // loop_header
      %s24 = sphi 0, %s28
      %p25 = scmp.ge.s32.totalorder %s24, 4
      %s34 = sphi 0, %s36
      %s37 = sphi 0, %s34
      %s38 = sphi 0, %s37
      %s54 = sphi 0, %s38
      %s58 = sphi 0, %s58
      %s60 = sphi 0, %s58
      %s61 = sphi 0, %s60
      %s75 = sphi 0, %s61
      %s79 = sphi 0, %s79
      %s81 = sphi 0, %s79
      %s82 = sphi 0, %s81
      %s96 = sphi 0, %s82
      %s100 = sphi 0, %s100
      %s102 = sphi 0, %s100
      %s103 = sphi 0, %s102
      %s117 = sphi 0, %s103
      %s121 = sphi 0, %s121
      %s123 = sphi 0, %s121
      %s124 = sphi 0, %s123
      %s138 = sphi 0, %s124
      %s142 = sphi 0, %s142
      %s144 = sphi 0, %s142
      %s145 = sphi 0, %s144
      %s159 = sphi 0, %s145
      %s163 = sphi 0, %s163
      %s165 = sphi 0, %s163
      %s166 = sphi 0, %s165
      %s180 = sphi 0, %s166
      %s184 = sphi 0, %s184
      %s186 = sphi 0, %s184
      %s187 = sphi 0, %s186
      %s201 = sphi 0, %s187
      %s205 = sphi 0, %s205
      %s207 = sphi 0, %s205
      %s208 = sphi 0, %s207
      %s222 = sphi 0, %s208
      %s228 = sphi 0, %s230
      %s231 = sphi 0, %s228
      %s232 = sphi 0, %s231
      %s248 = sphi 0, %s232
    $region4: #{tpu_custom_call.1} parent=1 // loop_header_branch
      %27 = sbr.rel (%p25) target = $region8
    $region5: #{tpu_custom_call.1} parent=1 // loop_body
      %s29 = ssub.s32 %s24, 1
      %s30 = ssub.s32 %s24, 2
      %s31 = sadd.s32 %s24, 1
      %s32 = ssub.s32 %s24, %s31
      %p33 = scmp.eq.s32.totalorder %s32, 0
      %s35 = sadd.s32 %s34, 1
      %s36 = scalar_select %p33, %s34, %s35
      %p39 = pneg %p33
      %p40 = scmp.eq.s32.totalorder %s24, 1
      %p41 = por %p39, %p40
      %p42 = scmp.ne.s32.totalorder %s34, %s37
      %p43 = scmp.eq.s32.totalorder %s24, 0
      %p44 = por %p42, %p43
      %p45 = scmp.ne.s32.totalorder %s34, %s37
      %p46 = scmp.eq.s32.totalorder %s29, 1
      %p47 = por %p45, %p46
      %p48 = scmp.ne.s32.totalorder %s37, %s38
      %p49 = scmp.eq.s32.totalorder %s29, 0
      %p50 = por %p48, %p49
      %p51 = scmp.ne.s32.totalorder %s37, %s38
      %p52 = scmp.eq.s32.totalorder %s30, 1
      %p53 = por %p51, %p52
      %p55 = scmp.ne.s32.totalorder %s38, %s54
      %p56 = scmp.eq.s32.totalorder %s30, 0
      %p57 = por %p55, %p56
      %s59 = sadd.s32 %s58, 1
      %p62 = scmp.eq.s32.totalorder %s24, 1
      %p63 = scmp.ne.s32.totalorder %s58, %s60
      %p64 = scmp.eq.s32.totalorder %s24, 0
      %p65 = por %p63, %p64
      %p66 = scmp.ne.s32.totalorder %s58, %s60
      %p67 = scmp.eq.s32.totalorder %s29, 1
      %p68 = por %p66, %p67
      %p69 = scmp.ne.s32.totalorder %s60, %s61
      %p70 = scmp.eq.s32.totalorder %s29, 0
      %p71 = por %p69, %p70
      %p72 = scmp.ne.s32.totalorder %s60, %s61
      %p73 = scmp.eq.s32.totalorder %s30, 1
      %p74 = por %p72, %p73
      %p76 = scmp.ne.s32.totalorder %s61, %s75
      %p77 = scmp.eq.s32.totalorder %s30, 0
      %p78 = por %p76, %p77
      %s80 = sadd.s32 %s79, 1
      %p83 = scmp.eq.s32.totalorder %s24, 1
      %p84 = scmp.ne.s32.totalorder %s79, %s81
      %p85 = scmp.eq.s32.totalorder %s24, 0
      %p86 = por %p84, %p85
      %p87 = scmp.ne.s32.totalorder %s79, %s81
      %p88 = scmp.eq.s32.totalorder %s29, 1
      %p89 = por %p87, %p88
      %p90 = scmp.ne.s32.totalorder %s81, %s82
      %p91 = scmp.eq.s32.totalorder %s29, 0
      %p92 = por %p90, %p91
      %p93 = scmp.ne.s32.totalorder %s81, %s82
      %p94 = scmp.eq.s32.totalorder %s30, 1
      %p95 = por %p93, %p94
      %p97 = scmp.ne.s32.totalorder %s82, %s96
      %p98 = scmp.eq.s32.totalorder %s30, 0
      %p99 = por %p97, %p98
      %s101 = sadd.s32 %s100, 1
      %p104 = scmp.eq.s32.totalorder %s24, 1
      %p105 = scmp.ne.s32.totalorder %s100, %s102
      %p106 = scmp.eq.s32.totalorder %s24, 0
      %p107 = por %p105, %p106
      %p108 = scmp.ne.s32.totalorder %s100, %s102
      %p109 = scmp.eq.s32.totalorder %s29, 1
      %p110 = por %p108, %p109
      %p111 = scmp.ne.s32.totalorder %s102, %s103
      %p112 = scmp.eq.s32.totalorder %s29, 0
      %p113 = por %p111, %p112
      %p114 = scmp.ne.s32.totalorder %s102, %s103
      %p115 = scmp.eq.s32.totalorder %s30, 1
      %p116 = por %p114, %p115
      %p118 = scmp.ne.s32.totalorder %s103, %s117
      %p119 = scmp.eq.s32.totalorder %s30, 0
      %p120 = por %p118, %p119
      %s122 = sadd.s32 %s121, 1
      %p125 = scmp.eq.s32.totalorder %s24, 1
      %p126 = scmp.ne.s32.totalorder %s121, %s123
      %p127 = scmp.eq.s32.totalorder %s24, 0
      %p128 = por %p126, %p127
      %p129 = scmp.ne.s32.totalorder %s121, %s123
      %p130 = scmp.eq.s32.totalorder %s29, 1
      %p131 = por %p129, %p130
      %p132 = scmp.ne.s32.totalorder %s123, %s124
      %p133 = scmp.eq.s32.totalorder %s29, 0
      %p134 = por %p132, %p133
      %p135 = scmp.ne.s32.totalorder %s123, %s124
      %p136 = scmp.eq.s32.totalorder %s30, 1
      %p137 = por %p135, %p136
      %p139 = scmp.ne.s32.totalorder %s124, %s138
      %p140 = scmp.eq.s32.totalorder %s30, 0
      %p141 = por %p139, %p140
      %s143 = sadd.s32 %s142, 1
      %p146 = scmp.eq.s32.totalorder %s24, 1
      %p147 = scmp.ne.s32.totalorder %s142, %s144
      %p148 = scmp.eq.s32.totalorder %s24, 0
      %p149 = por %p147, %p148
      %p150 = scmp.ne.s32.totalorder %s142, %s144
      %p151 = scmp.eq.s32.totalorder %s29, 1
      %p152 = por %p150, %p151
      %p153 = scmp.ne.s32.totalorder %s144, %s145
      %p154 = scmp.eq.s32.totalorder %s29, 0
      %p155 = por %p153, %p154
      %p156 = scmp.ne.s32.totalorder %s144, %s145
      %p157 = scmp.eq.s32.totalorder %s30, 1
      %p158 = por %p156, %p157
      %p160 = scmp.ne.s32.totalorder %s145, %s159
      %p161 = scmp.eq.s32.totalorder %s30, 0
      %p162 = por %p160, %p161
      %s164 = sadd.s32 %s163, 1
      %p167 = scmp.eq.s32.totalorder %s24, 1
      %p168 = scmp.ne.s32.totalorder %s163, %s165
      %p169 = scmp.eq.s32.totalorder %s24, 0
      %p170 = por %p168, %p169
      %p171 = scmp.ne.s32.totalorder %s163, %s165
      %p172 = scmp.eq.s32.totalorder %s29, 1
      %p173 = por %p171, %p172
      %p174 = scmp.ne.s32.totalorder %s165, %s166
      %p175 = scmp.eq.s32.totalorder %s29, 0
      %p176 = por %p174, %p175
      %p177 = scmp.ne.s32.totalorder %s165, %s166
      %p178 = scmp.eq.s32.totalorder %s30, 1
      %p179 = por %p177, %p178
      %p181 = scmp.ne.s32.totalorder %s166, %s180
      %p182 = scmp.eq.s32.totalorder %s30, 0
      %p183 = por %p181, %p182
      %s185 = sadd.s32 %s184, 1
      %p188 = scmp.eq.s32.totalorder %s24, 1
      %p189 = scmp.ne.s32.totalorder %s184, %s186
      %p190 = scmp.eq.s32.totalorder %s24, 0
      %p191 = por %p189, %p190
      %p192 = scmp.ne.s32.totalorder %s184, %s186
      %p193 = scmp.eq.s32.totalorder %s29, 1
      %p194 = por %p192, %p193
      %p195 = scmp.ne.s32.totalorder %s186, %s187
      %p196 = scmp.eq.s32.totalorder %s29, 0
      %p197 = por %p195, %p196
      %p198 = scmp.ne.s32.totalorder %s186, %s187
      %p199 = scmp.eq.s32.totalorder %s30, 1
      %p200 = por %p198, %p199
      %p202 = scmp.ne.s32.totalorder %s187, %s201
      %p203 = scmp.eq.s32.totalorder %s30, 0
      %p204 = por %p202, %p203
      %s206 = sadd.s32 %s205, 1
      %p209 = scmp.eq.s32.totalorder %s24, 1
      %p210 = scmp.ne.s32.totalorder %s205, %s207
      %p211 = scmp.eq.s32.totalorder %s24, 0
      %p212 = por %p210, %p211
      %p213 = scmp.ne.s32.totalorder %s205, %s207
      %p214 = scmp.eq.s32.totalorder %s29, 1
      %p215 = por %p213, %p214
      %p216 = scmp.ne.s32.totalorder %s207, %s208
      %p217 = scmp.eq.s32.totalorder %s29, 0
      %p218 = por %p216, %p217
      %p219 = scmp.ne.s32.totalorder %s207, %s208
      %p220 = scmp.eq.s32.totalorder %s30, 1
      %p221 = por %p219, %p220
      %p223 = scmp.ne.s32.totalorder %s208, %s222
      %p224 = scmp.eq.s32.totalorder %s30, 0
      %p225 = por %p223, %p224
      %s226 = ssub.s32 %s24, %s31
      %p227 = scmp.eq.s32.totalorder %s226, 0
      %s229 = sadd.s32 %s228, 1
      %s230 = scalar_select %p227, %s228, %s229
      %p233 = pneg %p227
      %p234 = scmp.eq.s32.totalorder %s24, 1
      %p235 = por %p233, %p234
      %p236 = scmp.ne.s32.totalorder %s228, %s231
      %p237 = scmp.eq.s32.totalorder %s24, 0
      %p238 = por %p236, %p237
      %p239 = scmp.ne.s32.totalorder %s228, %s231
      %p240 = scmp.eq.s32.totalorder %s29, 1
      %p241 = por %p239, %p240
      %p242 = scmp.ne.s32.totalorder %s231, %s232
      %p243 = scmp.eq.s32.totalorder %s29, 0
      %p244 = por %p242, %p243
      %p245 = scmp.ne.s32.totalorder %s231, %s232
      %p246 = scmp.eq.s32.totalorder %s30, 1
      %p247 = por %p245, %p246
      %p249 = scmp.ne.s32.totalorder %s232, %s248
      %p250 = scmp.eq.s32.totalorder %s30, 0
      %p251 = por %p249, %p250
      %p252 = scmp.le.s32.totalorder 1, %s24
      %p253 = scmp.lt.s32.totalorder %s24, 3
      %p254 = pnand %p252, %p253
      %p255 = pneg %p254
      // Predicated region
      $region9: #{tpu_custom_call.1} parent=5 // pred_check
        _
      $region10: #{tpu_custom_call.1} parent=5 // pred_check_branch
        %257 = sbr.rel (%p254) target = $region12
      $region11: #{tpu_custom_call.1} parent=5 // pred_region
        %s258 = ssub.s32 %s24, 1
        // Predicated region
        $region13: #{tpu_custom_call.1} parent=11 // pred_check
          %p259 = pneg %p71
        $region14: #{tpu_custom_call.1} parent=11 // pred_check_branch
          %261 = sbr.rel (%p259) target = $region16
        $region15: #{tpu_custom_call.1} parent=11 // pred_region
          %263 = vsyncadd [#allocation6], 0
          %s264 = sshll.u32 %s1, 4
          %s265 = int_to_ptr.hbm [resolvable:$true] %s264
          %s266 = sshll.u32 [#allocation5], 4
          %s267 = int_to_ptr.vmem [resolvable:$true] %s266
          %272 = dma.hbm_to_vmem [thread:$0]  %s265, 4096, %s267, [#allocation6], 128, 128, 8
        $region16: #{tpu_custom_call.1} parent=11 // pred_fallthru
          _
        // Predicated region
        $region17: #{tpu_custom_call.1} parent=11 // pred_check
          %p273 = pneg %p92
        $region18: #{tpu_custom_call.1} parent=11 // pred_check_branch
          %275 = sbr.rel (%p273) target = $region20
        $region19: #{tpu_custom_call.1} parent=11 // pred_region
          _
        $region20: #{tpu_custom_call.1} parent=11 // pred_fallthru
          _
        // Predicated region
        $region21: #{tpu_custom_call.1} parent=11 // pred_check
          %p276 = pneg %p113
        $region22: #{tpu_custom_call.1} parent=11 // pred_check_branch
          %278 = sbr.rel (%p276) target = $region24
        $region23: #{tpu_custom_call.1} parent=11 // pred_region
          %280 = vsyncadd [#allocation6], 0
          %s281 = sshll.u32 %s3, 4
          %s282 = int_to_ptr.hbm [resolvable:$true] %s281
          %s283 = sshll.u32 [#allocation7], 4
          %s284 = int_to_ptr.vmem [resolvable:$true] %s283
          %289 = dma.hbm_to_vmem [thread:$0]  %s282, 4096, %s284, [#allocation6], 256, 256, 16
        $region24: #{tpu_custom_call.1} parent=11 // pred_fallthru
          _
        // Predicated region
        $region25: #{tpu_custom_call.1} parent=11 // pred_check
          %p290 = pneg %p134
        $region26: #{tpu_custom_call.1} parent=11 // pred_check_branch
          %292 = sbr.rel (%p290) target = $region28
        $region27: #{tpu_custom_call.1} parent=11 // pred_region
          _
        $region28: #{tpu_custom_call.1} parent=11 // pred_fallthru
          _
        // Predicated region
        $region29: #{tpu_custom_call.1} parent=11 // pred_check
          %p293 = pneg %p155
        $region30: #{tpu_custom_call.1} parent=11 // pred_check_branch
          %295 = sbr.rel (%p293) target = $region32
        $region31: #{tpu_custom_call.1} parent=11 // pred_region
          %297 = vsyncadd [#allocation9], 0
          %s298 = sshll.u32 %s5, 4
          %s299 = int_to_ptr.hbm [resolvable:$true] %s298
          %s300 = sshll.u32 [#allocation8], 4
          %s301 = int_to_ptr.vmem [resolvable:$true] %s300
          %306 = dma.hbm_to_vmem [thread:$0]  %s299, 8192, %s301, [#allocation9], 256, 256, 16
        $region32: #{tpu_custom_call.1} parent=11 // pred_fallthru
          _
        // Predicated region
        $region33: #{tpu_custom_call.1} parent=11 // pred_check
          %p307 = pneg %p176
        $region34: #{tpu_custom_call.1} parent=11 // pred_check_branch
          %309 = sbr.rel (%p307) target = $region36
        $region35: #{tpu_custom_call.1} parent=11 // pred_region
          %311 = vsyncadd [#allocation9], 0
          %s312 = sshll.u32 %s6, 4
          %s313 = int_to_ptr.hbm [resolvable:$true] %s312
          %s314 = sshll.u32 [#allocation10], 4
          %s315 = int_to_ptr.vmem [resolvable:$true] %s314
          %320 = dma.hbm_to_vmem [thread:$0]  %s313, 2048, %s315, [#allocation9], 128, 128, 8
        $region36: #{tpu_custom_call.1} parent=11 // pred_fallthru
          _
        // Predicated region
        $region37: #{tpu_custom_call.1} parent=11 // pred_check
          %p321 = pneg %p197
        $region38: #{tpu_custom_call.1} parent=11 // pred_check_branch
          %323 = sbr.rel (%p321) target = $region40
        $region39: #{tpu_custom_call.1} parent=11 // pred_region
          %325 = vsyncadd [#allocation12], 0
          %s326 = sshll.u32 %s7, 4
          %s327 = int_to_ptr.hbm [resolvable:$true] %s326
          %s328 = sshll.u32 [#allocation11], 4
          %s329 = int_to_ptr.vmem [resolvable:$true] %s328
          %334 = dma.hbm_to_vmem [thread:$0]  %s327, 4096, %s329, [#allocation12], 128, 128, 8
        $region40: #{tpu_custom_call.1} parent=11 // pred_fallthru
          _
        // Predicated region
        $region41: #{tpu_custom_call.1} parent=11 // pred_check
          %p335 = pneg %p218
        $region42: #{tpu_custom_call.1} parent=11 // pred_check_branch
          %337 = sbr.rel (%p335) target = $region44
        $region43: #{tpu_custom_call.1} parent=11 // pred_region
          _
        $region44: #{tpu_custom_call.1} parent=11 // pred_fallthru
          _
      $region12: #{tpu_custom_call.1} parent=5 // pred_fallthru
        _
      %p338 = scmp.lt.s32.totalorder %s24, 2
      // Predicated region
      $region45: #{tpu_custom_call.1} parent=5 // pred_check
        %p339 = pneg %p338
      $region46: #{tpu_custom_call.1} parent=5 // pred_check_branch
        %341 = sbr.rel (%p339) target = $region48
      $region47: #{tpu_custom_call.1} parent=5 // pred_region
        // Predicated region
        $region49: #{tpu_custom_call.1} parent=47 // pred_check
          %p342 = pneg %p44
        $region50: #{tpu_custom_call.1} parent=47 // pred_check_branch
          %344 = sbr.rel (%p342) target = $region52
        $region51: #{tpu_custom_call.1} parent=47 // pred_region
          %s345 = sand.u32 %s34, 1
          %s346 = scalar_lea.sflag [#allocation3], %s345
          %s347 = sand.u32 %s34, 1
          %s348 = smul.addr %s347, 16
          %s349 = scalar_lea.vmem [#allocation2], %s348
          %351 = vsyncadd %s346, 0
          %s352 = smul.addr %s24, 2
          %s353 = smul.addr %s352, 8
          %s354 = scalar_lea.hbm %s0, %s353
          %s356 = sshll.u32 %s354, 4
          %s357 = int_to_ptr.hbm [resolvable:$true] %s356
          %s358 = sshll.u32 %s349, 4
          %s359 = int_to_ptr.vmem [resolvable:$true] %s358
          %361 = dma.hbm_to_vmem [thread:$0]  %s357, 256, %s359, %s346
        $region52: #{tpu_custom_call.1} parent=47 // pred_fallthru
          _
      $region48: #{tpu_custom_call.1} parent=5 // pred_fallthru
        _
      %p362 = scmp.le.s32.totalorder 1, %s24
      %p363 = scmp.lt.s32.totalorder %s24, 3
      %p364 = pnand %p362, %p363
      %p365 = pneg %p364
      // Predicated region
      $region53: #{tpu_custom_call.1} parent=5 // pred_check
        _
      $region54: #{tpu_custom_call.1} parent=5 // pred_check_branch
        %367 = sbr.rel (%p364) target = $region56
      $region55: #{tpu_custom_call.1} parent=5 // pred_region
        %s368 = ssub.s32 %s24, 1
        %s369 = sand.u32 %s37, 1
        %s370 = scalar_lea.sflag [#allocation3], %s369
        %s371 = sand.u32 %s37, 1
        %s372 = smul.addr %s371, 16
        %s373 = scalar_lea.vmem [#allocation2], %s372
        // Predicated region
        $region57: #{tpu_custom_call.1} parent=55 // pred_check
          %p374 = pneg %p50
        $region58: #{tpu_custom_call.1} parent=55 // pred_check_branch
          %376 = sbr.rel (%p374) target = $region60
        $region59: #{tpu_custom_call.1} parent=55 // pred_region
          %378 = dma.done %s370, 256
        $region60: #{tpu_custom_call.1} parent=55 // pred_fallthru
          _
        // Predicated region
        $region61: #{tpu_custom_call.1} parent=55 // pred_check
          %p379 = pneg %p71
        $region62: #{tpu_custom_call.1} parent=55 // pred_check_branch
          %381 = sbr.rel (%p379) target = $region64
        $region63: #{tpu_custom_call.1} parent=55 // pred_region
          %383 = dma.done [#allocation6], 4096
        $region64: #{tpu_custom_call.1} parent=55 // pred_fallthru
          _
        // Predicated region
        $region65: #{tpu_custom_call.1} parent=55 // pred_check
          %p384 = pneg %p113
        $region66: #{tpu_custom_call.1} parent=55 // pred_check_branch
          %386 = sbr.rel (%p384) target = $region68
        $region67: #{tpu_custom_call.1} parent=55 // pred_region
          %388 = dma.done [#allocation6], 4096
        $region68: #{tpu_custom_call.1} parent=55 // pred_fallthru
          _
        // Predicated region
        $region69: #{tpu_custom_call.1} parent=55 // pred_check
          %p389 = pneg %p155
        $region70: #{tpu_custom_call.1} parent=55 // pred_check_branch
          %391 = sbr.rel (%p389) target = $region72
        $region71: #{tpu_custom_call.1} parent=55 // pred_region
          %393 = dma.done [#allocation9], 8192
        $region72: #{tpu_custom_call.1} parent=55 // pred_fallthru
          _
        // Predicated region
        $region73: #{tpu_custom_call.1} parent=55 // pred_check
          %p394 = pneg %p176
        $region74: #{tpu_custom_call.1} parent=55 // pred_check_branch
          %396 = sbr.rel (%p394) target = $region76
        $region75: #{tpu_custom_call.1} parent=55 // pred_region
          %398 = dma.done [#allocation9], 2048
        $region76: #{tpu_custom_call.1} parent=55 // pred_fallthru
          _
        // Predicated region
        $region77: #{tpu_custom_call.1} parent=55 // pred_check
          %p399 = pneg %p197
        $region78: #{tpu_custom_call.1} parent=55 // pred_check_branch
          %401 = sbr.rel (%p399) target = $region80
        $region79: #{tpu_custom_call.1} parent=55 // pred_region
          %403 = dma.done [#allocation12], 4096
        $region80: #{tpu_custom_call.1} parent=55 // pred_fallthru
          _
        %s404 = sand.u32 %s37, 1
        %s405 = scalar_lea.sflag [#allocation3], %s404
        %s406 = sand.u32 %s37, 1
        %s407 = smul.addr %s406, 16
        %s408 = scalar_lea.vmem [#allocation2], %s407
        %p409 = pneg %p50
        %p410 = pneg %p47
        %p411 = pneg %p71
        %p412 = pneg %p68
        %p413 = pneg %p92
        %p414 = pneg %p89
        %p415 = pneg %p113
        %p416 = pneg %p110
        %p417 = pneg %p134
        %p418 = pneg %p131
        %p419 = pneg %p155
        %p420 = pneg %p152
        %p421 = pneg %p176
        %p422 = pneg %p173
        %p423 = pneg %p197
        %p424 = pneg %p194
        %p425 = pneg %p218
        %p426 = pneg %p215
        %p427 = pneg %p244
        %p428 = pneg %p241
        %s429 = sand.u32 %s231, 1
        %s430 = scalar_lea.sflag [#allocation4], %s429
        %s431 = sand.u32 %s231, 1
        %s432 = smul.addr %s431, 8
        %s433 = scalar_lea.vmem [#allocation13], %s432
        %v434 = vld [vmem:[%s373] sm:$0xff]
        %v435 = vld [vmem:[%s373 + $0x8] sm:$0xff]
        %v436 = vld [vmem:[#allocation5] sm:$0xff]
        %v437 = vld [vmem:[#allocation5 + $0x8] sm:$0xff]
        %v438 = vld [vmem:[#allocation5 + $0x10] sm:$0xff]
        %v439 = vld [vmem:[#allocation5 + $0x18] sm:$0xff]
        %v440 = vld [vmem:[#allocation5 + $0x20] sm:$0xff]
        %v441 = vld [vmem:[#allocation5 + $0x28] sm:$0xff]
        %v442 = vld [vmem:[#allocation5 + $0x30] sm:$0xff]
        %v443 = vld [vmem:[#allocation5 + $0x38] sm:$0xff]
        %v444 = vld [vmem:[#allocation5 + $0x40] sm:$0xff]
        %v445 = vld [vmem:[#allocation5 + $0x48] sm:$0xff]
        %v446 = vld [vmem:[#allocation5 + $0x50] sm:$0xff]
        %v447 = vld [vmem:[#allocation5 + $0x58] sm:$0xff]
        %v448 = vld [vmem:[#allocation5 + $0x60] sm:$0xff]
        %v449 = vld [vmem:[#allocation5 + $0x68] sm:$0xff]
        %v450 = vld [vmem:[#allocation5 + $0x70] sm:$0xff]
        %v451 = vld [vmem:[#allocation5 + $0x78] sm:$0xff]
        %v452 = vld [vmem:[#allocation5 + $0x80] sm:$0xff]
        %v453 = vld [vmem:[#allocation5 + $0x88] sm:$0xff]
        %v454 = vld [vmem:[#allocation5 + $0x90] sm:$0xff]
        %v455 = vld [vmem:[#allocation5 + $0x98] sm:$0xff]
        %v456 = vld [vmem:[#allocation5 + $0xa0] sm:$0xff]
        %v457 = vld [vmem:[#allocation5 + $0xa8] sm:$0xff]
        %v458 = vld [vmem:[#allocation5 + $0xb0] sm:$0xff]
        %v459 = vld [vmem:[#allocation5 + $0xb8] sm:$0xff]
        %v460 = vld [vmem:[#allocation5 + $0xc0] sm:$0xff]
        %v461 = vld [vmem:[#allocation5 + $0xc8] sm:$0xff]
        %v462 = vld [vmem:[#allocation5 + $0xd0] sm:$0xff]
        %v463 = vld [vmem:[#allocation5 + $0xd8] sm:$0xff]
        %v464 = vld [vmem:[#allocation5 + $0xe0] sm:$0xff]
        %v465 = vld [vmem:[#allocation5 + $0xe8] sm:$0xff]
        %v466 = vld [vmem:[#allocation5 + $0xf0] sm:$0xff]
        %v467 = vld [vmem:[#allocation5 + $0xf8] sm:$0xff]
        %v468 = vld [vmem:[%s2] sm:$0x1]
        %v470 = vperm.slane %v468, 0
        %472 = vmatpush.msra.mxu0 %v451
        %473 = vmatpush.msra.mxu0 %v450
        %474 = vmatpush.msra.mxu0 %v449
        %475 = vmatpush.msra.mxu0 %v448
        %476 = vmatpush.msra.mxu0 %v447
        %477 = vmatpush.msra.mxu0 %v446
        %478 = vmatpush.msra.mxu0 %v445
        %479 = vmatpush.msra.mxu0 %v444
        %480 = vmatpush.msra.mxu0 %v443
        %481 = vmatpush.msra.mxu0 %v442
        %482 = vmatpush.msra.mxu0 %v441
        %483 = vmatpush.msra.mxu0 %v440
        %484 = vmatpush.msra.mxu0 %v439
        %485 = vmatpush.msra.mxu0 %v438
        %486 = vmatpush.msra.mxu0 %v437
        %487 = vmatpush.msra.mxu0 %v436
        %488 = vmatmul.f32.gmra.mxu0 %v434
        %v489 = vpop.f32.mrf.mxu0
        %v490 = vadd.f32 %v470, %v489
        %491 = vdwg.mxu0
        %492 = vmatpush.msra.mxu0 %v467
        %493 = vmatpush.msra.mxu0 %v466
        %494 = vmatpush.msra.mxu0 %v465
        %495 = vmatpush.msra.mxu0 %v464
        %496 = vmatpush.msra.mxu0 %v463
        %497 = vmatpush.msra.mxu0 %v462
        %498 = vmatpush.msra.mxu0 %v461
        %499 = vmatpush.msra.mxu0 %v460
        %500 = vmatpush.msra.mxu0 %v459
        %501 = vmatpush.msra.mxu0 %v458
        %502 = vmatpush.msra.mxu0 %v457
        %503 = vmatpush.msra.mxu0 %v456
        %504 = vmatpush.msra.mxu0 %v455
        %505 = vmatpush.msra.mxu0 %v454
        %506 = vmatpush.msra.mxu0 %v453
        %507 = vmatpush.msra.mxu0 %v452
        %508 = vmatmul.f32.gmra.mxu0 %v435
        %v509 = vpop.f32.mrf.mxu0
        %v510 = vadd.f32 %v490, %v509
        %511 = vdwg.mxu0
        %v512 = vmax.f32 %v510, 0.0
        %v513 = vld [vmem:[#allocation7] sm:$0xff]
        %v514 = vld [vmem:[#allocation7 + $0x8] sm:$0xff]
        %v515 = vld [vmem:[#allocation7 + $0x10] sm:$0xff]
        %v516 = vld [vmem:[#allocation7 + $0x18] sm:$0xff]
        %v517 = vld [vmem:[#allocation7 + $0x20] sm:$0xff]
        %v518 = vld [vmem:[#allocation7 + $0x28] sm:$0xff]
        %v519 = vld [vmem:[#allocation7 + $0x30] sm:$0xff]
        %v520 = vld [vmem:[#allocation7 + $0x38] sm:$0xff]
        %v521 = vld [vmem:[#allocation7 + $0x40] sm:$0xff]
        %v522 = vld [vmem:[#allocation7 + $0x48] sm:$0xff]
        %v523 = vld [vmem:[#allocation7 + $0x50] sm:$0xff]
        %v524 = vld [vmem:[#allocation7 + $0x58] sm:$0xff]
        %v525 = vld [vmem:[#allocation7 + $0x60] sm:$0xff]
        %v526 = vld [vmem:[#allocation7 + $0x68] sm:$0xff]
        %v527 = vld [vmem:[#allocation7 + $0x70] sm:$0xff]
        %v528 = vld [vmem:[#allocation7 + $0x78] sm:$0xff]
        %v529 = vld [vmem:[#allocation7 + $0x80] sm:$0xff]
        %v530 = vld [vmem:[#allocation7 + $0x88] sm:$0xff]
        %v531 = vld [vmem:[#allocation7 + $0x90] sm:$0xff]
        %v532 = vld [vmem:[#allocation7 + $0x98] sm:$0xff]
        %v533 = vld [vmem:[#allocation7 + $0xa0] sm:$0xff]
        %v534 = vld [vmem:[#allocation7 + $0xa8] sm:$0xff]
        %v535 = vld [vmem:[#allocation7 + $0xb0] sm:$0xff]
        %v536 = vld [vmem:[#allocation7 + $0xb8] sm:$0xff]
        %v537 = vld [vmem:[#allocation7 + $0xc0] sm:$0xff]
        %v538 = vld [vmem:[#allocation7 + $0xc8] sm:$0xff]
        %v539 = vld [vmem:[#allocation7 + $0xd0] sm:$0xff]
        %v540 = vld [vmem:[#allocation7 + $0xd8] sm:$0xff]
        %v541 = vld [vmem:[#allocation7 + $0xe0] sm:$0xff]
        %v542 = vld [vmem:[#allocation7 + $0xe8] sm:$0xff]
        %v543 = vld [vmem:[#allocation7 + $0xf0] sm:$0xff]
        %v544 = vld [vmem:[#allocation7 + $0xf8] sm:$0xff]
        %v545 = vld [vmem:[%s4] sm:$0x3]
        %v547 = vperm.slane %v545, 0
        %v548 = vperm.slane %v545, 1
        %551 = vmatpush.msra.mxu0 %v543
        %552 = vmatpush.msra.mxu0 %v541
        %553 = vmatpush.msra.mxu0 %v539
        %554 = vmatpush.msra.mxu0 %v537
        %555 = vmatpush.msra.mxu0 %v535
        %556 = vmatpush.msra.mxu0 %v533
        %557 = vmatpush.msra.mxu0 %v531
        %558 = vmatpush.msra.mxu0 %v529
        %559 = vmatpush.msra.mxu0 %v527
        %560 = vmatpush.msra.mxu0 %v525
        %561 = vmatpush.msra.mxu0 %v523
        %562 = vmatpush.msra.mxu0 %v521
        %563 = vmatpush.msra.mxu0 %v519
        %564 = vmatpush.msra.mxu0 %v517
        %565 = vmatpush.msra.mxu0 %v515
        %566 = vmatpush.msra.mxu0 %v513
        %567 = vmatmul.f32.gmra.mxu0 %v512
        %v568 = vpop.f32.mrf.mxu0
        %v569 = vadd.f32 %v547, %v568
        %570 = vdwg.mxu0
        %571 = vmatpush.msra.mxu0 %v544
        %572 = vmatpush.msra.mxu0 %v542
        %573 = vmatpush.msra.mxu0 %v540
        %574 = vmatpush.msra.mxu0 %v538
        %575 = vmatpush.msra.mxu0 %v536
        %576 = vmatpush.msra.mxu0 %v534
        %577 = vmatpush.msra.mxu0 %v532
        %578 = vmatpush.msra.mxu0 %v530
        %579 = vmatpush.msra.mxu0 %v528
        %580 = vmatpush.msra.mxu0 %v526
        %581 = vmatpush.msra.mxu0 %v524
        %582 = vmatpush.msra.mxu0 %v522
        %583 = vmatpush.msra.mxu0 %v520
        %584 = vmatpush.msra.mxu0 %v518
        %585 = vmatpush.msra.mxu0 %v516
        %586 = vmatpush.msra.mxu0 %v514
        %587 = vmatmul.f32.gmra.mxu0 %v512
        %v588 = vpop.f32.mrf.mxu0
        %v589 = vadd.f32 %v548, %v588
        %590 = vdwg.mxu0
        %591 = vmax.xlane.f32.xlu0 %v569
        %v592 = vpop.xlane.xlu0 %591
        %v593 = vsub.f32 %v569, %v592
        %v594 = vmul.f32 %v593, 1.442695
        %v595 = vpow.pop %v594
        %596 = vadd.xlane.f32.xlu0 %v595
        %v597 = vpop.xlane.xlu0 %596
        %v598 = vrcp.pop %v597
        %v599 = vmul.f32 %v597, %v598
        %v600 = vsub.f32 1.0, %v599
        %v601 = vmul.f32 %v598, %v600
        %v602 = vadd.f32 %v598, %v601
        %vm603 = vweird.f32 %v597
        %vm604 = vweird.f32 %v598
        %vm605 = vmor %vm603, %vm604
        %v606 = vsel %vm605, %v598, %v602
        %v607 = vand.u32 2147483647, %v597
        %vm608 = vcmp.eq.f32.partialorder %v607, 8.507059e+37
        %v609 = vand.u32 %v597, 2147483648
        %v610 = vor.u32 1.1754944e-38, %v609
        %v611 = vsel %vm608, %v610, %v606
        %v612 = vmul.f32 %v595, %v611
        %v613 = vld [vmem:[%s8] sm:$0x1]
        %v615 = vperm.slane %v613, 0
        %v617 = vadd.f32 %v612, %v615
        %618 = vadd.xlane.f32.xlu0 %v617
        %v619 = vpop.xlane.xlu0 %618
        %v620 = vrcp.pop %v619
        %v621 = vmul.f32 %v619, %v620
        %v622 = vsub.f32 1.0, %v621
        %v623 = vmul.f32 %v620, %v622
        %v624 = vadd.f32 %v620, %v623
        %vm625 = vweird.f32 %v619
        %vm626 = vweird.f32 %v620
        %vm627 = vmor %vm625, %vm626
        %v628 = vsel %vm627, %v620, %v624
        %v629 = vand.u32 2147483647, %v619
        %vm630 = vcmp.eq.f32.partialorder %v629, 8.507059e+37
        %v631 = vand.u32 %v619, 2147483648
        %v632 = vor.u32 1.1754944e-38, %v631
        %v633 = vsel %vm630, %v632, %v628
        %v634 = vmul.f32 %v617, %v633
        %635 = vmax.xlane.f32.xlu0 %v589
        %v636 = vpop.xlane.xlu0 %635
        %v637 = vsub.f32 %v589, %v636
        %v638 = vmul.f32 %v637, 1.442695
        %v639 = vpow.pop %v638
        %640 = vadd.xlane.f32.xlu0 %v639
        %v641 = vpop.xlane.xlu0 %640
        %v642 = vrcp.pop %v641
        %v643 = vmul.f32 %v641, %v642
        %v644 = vsub.f32 1.0, %v643
        %v645 = vmul.f32 %v642, %v644
        %v646 = vadd.f32 %v642, %v645
        %vm647 = vweird.f32 %v641
        %vm648 = vweird.f32 %v642
        %vm649 = vmor %vm647, %vm648
        %v650 = vsel %vm649, %v642, %v646
        %v651 = vand.u32 2147483647, %v641
        %vm652 = vcmp.eq.f32.partialorder %v651, 8.507059e+37
        %v653 = vand.u32 %v641, 2147483648
        %v654 = vor.u32 1.1754944e-38, %v653
        %v655 = vsel %vm652, %v654, %v650
        %v656 = vmul.f32 %v639, %v655
        %v657 = vadd.f32 %v656, %v615
        %658 = vadd.xlane.f32.xlu0 %v657
        %v659 = vpop.xlane.xlu0 %658
        %v660 = vrcp.pop %v659
        %v661 = vmul.f32 %v659, %v660
        %v662 = vsub.f32 1.0, %v661
        %v663 = vmul.f32 %v660, %v662
        %v664 = vadd.f32 %v660, %v663
        %vm665 = vweird.f32 %v659
        %vm666 = vweird.f32 %v660
        %vm667 = vmor %vm665, %vm666
        %v668 = vsel %vm667, %v660, %v664
        %v669 = vand.u32 2147483647, %v659
        %vm670 = vcmp.eq.f32.partialorder %v669, 8.507059e+37
        %v671 = vand.u32 %v659, 2147483648
        %v672 = vor.u32 1.1754944e-38, %v671
        %v673 = vsel %vm670, %v672, %v668
        %v674 = vmul.f32 %v657, %v673
        %v675 = vld [vmem:[#allocation8] sm:$0xff]
        %v676 = vld [vmem:[#allocation8 + $0x8] sm:$0xff]
        %v677 = vld [vmem:[#allocation8 + $0x10] sm:$0xff]
        %v678 = vld [vmem:[#allocation8 + $0x18] sm:$0xff]
        %v679 = vld [vmem:[#allocation8 + $0x20] sm:$0xff]
        %v680 = vld [vmem:[#allocation8 + $0x28] sm:$0xff]
        %v681 = vld [vmem:[#allocation8 + $0x30] sm:$0xff]
        %v682 = vld [vmem:[#allocation8 + $0x38] sm:$0xff]
        %v683 = vld [vmem:[#allocation8 + $0x40] sm:$0xff]
        %v684 = vld [vmem:[#allocation8 + $0x48] sm:$0xff]
        %v685 = vld [vmem:[#allocation8 + $0x50] sm:$0xff]
        %v686 = vld [vmem:[#allocation8 + $0x58] sm:$0xff]
        %v687 = vld [vmem:[#allocation8 + $0x60] sm:$0xff]
        %v688 = vld [vmem:[#allocation8 + $0x68] sm:$0xff]
        %v689 = vld [vmem:[#allocation8 + $0x70] sm:$0xff]
        %v690 = vld [vmem:[#allocation8 + $0x78] sm:$0xff]
        %v691 = vld [vmem:[#allocation8 + $0x80] sm:$0xff]
        %v692 = vld [vmem:[#allocation8 + $0x88] sm:$0xff]
        %v693 = vld [vmem:[#allocation8 + $0x90] sm:$0xff]
        %v694 = vld [vmem:[#allocation8 + $0x98] sm:$0xff]
        %v695 = vld [vmem:[#allocation8 + $0xa0] sm:$0xff]
        %v696 = vld [vmem:[#allocation8 + $0xa8] sm:$0xff]
        %v697 = vld [vmem:[#allocation8 + $0xb0] sm:$0xff]
        %v698 = vld [vmem:[#allocation8 + $0xb8] sm:$0xff]
        %v699 = vld [vmem:[#allocation8 + $0xc0] sm:$0xff]
        %v700 = vld [vmem:[#allocation8 + $0xc8] sm:$0xff]
        %v701 = vld [vmem:[#allocation8 + $0xd0] sm:$0xff]
        %v702 = vld [vmem:[#allocation8 + $0xd8] sm:$0xff]
        %v703 = vld [vmem:[#allocation8 + $0xe0] sm:$0xff]
        %v704 = vld [vmem:[#allocation8 + $0xe8] sm:$0xff]
        %v705 = vld [vmem:[#allocation8 + $0xf0] sm:$0xff]
        %v706 = vld [vmem:[#allocation8 + $0xf8] sm:$0xff]
        %v707 = vld [vmem:[#allocation8 + $0x100] sm:$0xff]
        %v708 = vld [vmem:[#allocation8 + $0x108] sm:$0xff]
        %v709 = vld [vmem:[#allocation8 + $0x110] sm:$0xff]
        %v710 = vld [vmem:[#allocation8 + $0x118] sm:$0xff]
        %v711 = vld [vmem:[#allocation8 + $0x120] sm:$0xff]
        %v712 = vld [vmem:[#allocation8 + $0x128] sm:$0xff]
        %v713 = vld [vmem:[#allocation8 + $0x130] sm:$0xff]
        %v714 = vld [vmem:[#allocation8 + $0x138] sm:$0xff]
        %v715 = vld [vmem:[#allocation8 + $0x140] sm:$0xff]
        %v716 = vld [vmem:[#allocation8 + $0x148] sm:$0xff]
        %v717 = vld [vmem:[#allocation8 + $0x150] sm:$0xff]
        %v718 = vld [vmem:[#allocation8 + $0x158] sm:$0xff]
        %v719 = vld [vmem:[#allocation8 + $0x160] sm:$0xff]
        %v720 = vld [vmem:[#allocation8 + $0x168] sm:$0xff]
        %v721 = vld [vmem:[#allocation8 + $0x170] sm:$0xff]
        %v722 = vld [vmem:[#allocation8 + $0x178] sm:$0xff]
        %v723 = vld [vmem:[#allocation8 + $0x180] sm:$0xff]
        %v724 = vld [vmem:[#allocation8 + $0x188] sm:$0xff]
        %v725 = vld [vmem:[#allocation8 + $0x190] sm:$0xff]
        %v726 = vld [vmem:[#allocation8 + $0x198] sm:$0xff]
        %v727 = vld [vmem:[#allocation8 + $0x1a0] sm:$0xff]
        %v728 = vld [vmem:[#allocation8 + $0x1a8] sm:$0xff]
        %v729 = vld [vmem:[#allocation8 + $0x1b0] sm:$0xff]
        %v730 = vld [vmem:[#allocation8 + $0x1b8] sm:$0xff]
        %v731 = vld [vmem:[#allocation8 + $0x1c0] sm:$0xff]
        %v732 = vld [vmem:[#allocation8 + $0x1c8] sm:$0xff]
        %v733 = vld [vmem:[#allocation8 + $0x1d0] sm:$0xff]
        %v734 = vld [vmem:[#allocation8 + $0x1d8] sm:$0xff]
        %v735 = vld [vmem:[#allocation8 + $0x1e0] sm:$0xff]
        %v736 = vld [vmem:[#allocation8 + $0x1e8] sm:$0xff]
        %v737 = vld [vmem:[#allocation8 + $0x1f0] sm:$0xff]
        %v738 = vld [vmem:[#allocation8 + $0x1f8] sm:$0xff]
        %739 = vmatpush.msra.mxu0 %v705
        %740 = vmatpush.msra.mxu0 %v703
        %741 = vmatpush.msra.mxu0 %v701
        %742 = vmatpush.msra.mxu0 %v699
        %743 = vmatpush.msra.mxu0 %v697
        %744 = vmatpush.msra.mxu0 %v695
        %745 = vmatpush.msra.mxu0 %v693
        %746 = vmatpush.msra.mxu0 %v691
        %747 = vmatpush.msra.mxu0 %v689
        %748 = vmatpush.msra.mxu0 %v687
        %749 = vmatpush.msra.mxu0 %v685
        %750 = vmatpush.msra.mxu0 %v683
        %751 = vmatpush.msra.mxu0 %v681
        %752 = vmatpush.msra.mxu0 %v679
        %753 = vmatpush.msra.mxu0 %v677
        %754 = vmatpush.msra.mxu0 %v675
        %755 = vmatmul.f32.gmra.mxu0 %v634
        %v756 = vpop.f32.mrf.mxu0
        %v757 = vadd.f32 0.0, %v756
        %758 = vdwg.mxu0
        %759 = vmatpush.msra.mxu0 %v737
        %760 = vmatpush.msra.mxu0 %v735
        %761 = vmatpush.msra.mxu0 %v733
        %762 = vmatpush.msra.mxu0 %v731
        %763 = vmatpush.msra.mxu0 %v729
        %764 = vmatpush.msra.mxu0 %v727
        %765 = vmatpush.msra.mxu0 %v725
        %766 = vmatpush.msra.mxu0 %v723
        %767 = vmatpush.msra.mxu0 %v721
        %768 = vmatpush.msra.mxu0 %v719
        %769 = vmatpush.msra.mxu0 %v717
        %770 = vmatpush.msra.mxu0 %v715
        %771 = vmatpush.msra.mxu0 %v713
        %772 = vmatpush.msra.mxu0 %v711
        %773 = vmatpush.msra.mxu0 %v709
        %774 = vmatpush.msra.mxu0 %v707
        %775 = vmatmul.f32.gmra.mxu0 %v674
        %v776 = vpop.f32.mrf.mxu0
        %v777 = vadd.f32 %v757, %v776
        %778 = vdwg.mxu0
        %779 = vmatpush.msra.mxu0 %v706
        %780 = vmatpush.msra.mxu0 %v704
        %781 = vmatpush.msra.mxu0 %v702
        %782 = vmatpush.msra.mxu0 %v700
        %783 = vmatpush.msra.mxu0 %v698
        %784 = vmatpush.msra.mxu0 %v696
        %785 = vmatpush.msra.mxu0 %v694
        %786 = vmatpush.msra.mxu0 %v692
        %787 = vmatpush.msra.mxu0 %v690
        %788 = vmatpush.msra.mxu0 %v688
        %789 = vmatpush.msra.mxu0 %v686
        %790 = vmatpush.msra.mxu0 %v684
        %791 = vmatpush.msra.mxu0 %v682
        %792 = vmatpush.msra.mxu0 %v680
        %793 = vmatpush.msra.mxu0 %v678
        %794 = vmatpush.msra.mxu0 %v676
        %795 = vmatmul.f32.gmra.mxu0 %v634
        %v796 = vpop.f32.mrf.mxu0
        %v797 = vadd.f32 0.0, %v796
        %798 = vdwg.mxu0
        %799 = vmatpush.msra.mxu0 %v738
        %800 = vmatpush.msra.mxu0 %v736
        %801 = vmatpush.msra.mxu0 %v734
        %802 = vmatpush.msra.mxu0 %v732
        %803 = vmatpush.msra.mxu0 %v730
        %804 = vmatpush.msra.mxu0 %v728
        %805 = vmatpush.msra.mxu0 %v726
        %806 = vmatpush.msra.mxu0 %v724
        %807 = vmatpush.msra.mxu0 %v722
        %808 = vmatpush.msra.mxu0 %v720
        %809 = vmatpush.msra.mxu0 %v718
        %810 = vmatpush.msra.mxu0 %v716
        %811 = vmatpush.msra.mxu0 %v714
        %812 = vmatpush.msra.mxu0 %v712
        %813 = vmatpush.msra.mxu0 %v710
        %814 = vmatpush.msra.mxu0 %v708
        %815 = vmatmul.f32.gmra.mxu0 %v674
        %v816 = vpop.f32.mrf.mxu0
        %v817 = vadd.f32 %v797, %v816
        %818 = vdwg.mxu0
        %v819 = vmul.f32 %v777, %v817
        %v820 = vld [vmem:[#allocation10] sm:$0xff]
        %v821 = vld [vmem:[#allocation10 + $0x8] sm:$0xff]
        %v822 = vld [vmem:[#allocation10 + $0x10] sm:$0xff]
        %v823 = vld [vmem:[#allocation10 + $0x18] sm:$0xff]
        %v824 = vld [vmem:[#allocation10 + $0x20] sm:$0xff]
        %v825 = vld [vmem:[#allocation10 + $0x28] sm:$0xff]
        %v826 = vld [vmem:[#allocation10 + $0x30] sm:$0xff]
        %v827 = vld [vmem:[#allocation10 + $0x38] sm:$0xff]
        %v828 = vld [vmem:[#allocation10 + $0x40] sm:$0xff]
        %v829 = vld [vmem:[#allocation10 + $0x48] sm:$0xff]
        %v830 = vld [vmem:[#allocation10 + $0x50] sm:$0xff]
        %v831 = vld [vmem:[#allocation10 + $0x58] sm:$0xff]
        %v832 = vld [vmem:[#allocation10 + $0x60] sm:$0xff]
        %v833 = vld [vmem:[#allocation10 + $0x68] sm:$0xff]
        %v834 = vld [vmem:[#allocation10 + $0x70] sm:$0xff]
        %v835 = vld [vmem:[#allocation10 + $0x78] sm:$0xff]
        %v836 = vld [vmem:[#allocation11] sm:$0xff]
        %v837 = vld [vmem:[#allocation11 + $0x8] sm:$0xff]
        %v838 = vld [vmem:[#allocation11 + $0x10] sm:$0xff]
        %v839 = vld [vmem:[#allocation11 + $0x18] sm:$0xff]
        %v840 = vld [vmem:[#allocation11 + $0x20] sm:$0xff]
        %v841 = vld [vmem:[#allocation11 + $0x28] sm:$0xff]
        %v842 = vld [vmem:[#allocation11 + $0x30] sm:$0xff]
        %v843 = vld [vmem:[#allocation11 + $0x38] sm:$0xff]
        %v844 = vld [vmem:[#allocation11 + $0x40] sm:$0xff]
        %v845 = vld [vmem:[#allocation11 + $0x48] sm:$0xff]
        %v846 = vld [vmem:[#allocation11 + $0x50] sm:$0xff]
        %v847 = vld [vmem:[#allocation11 + $0x58] sm:$0xff]
        %v848 = vld [vmem:[#allocation11 + $0x60] sm:$0xff]
        %v849 = vld [vmem:[#allocation11 + $0x68] sm:$0xff]
        %v850 = vld [vmem:[#allocation11 + $0x70] sm:$0xff]
        %v851 = vld [vmem:[#allocation11 + $0x78] sm:$0xff]
        %v852 = vld [vmem:[#allocation11 + $0x80] sm:$0xff]
        %v853 = vld [vmem:[#allocation11 + $0x88] sm:$0xff]
        %v854 = vld [vmem:[#allocation11 + $0x90] sm:$0xff]
        %v855 = vld [vmem:[#allocation11 + $0x98] sm:$0xff]
        %v856 = vld [vmem:[#allocation11 + $0xa0] sm:$0xff]
        %v857 = vld [vmem:[#allocation11 + $0xa8] sm:$0xff]
        %v858 = vld [vmem:[#allocation11 + $0xb0] sm:$0xff]
        %v859 = vld [vmem:[#allocation11 + $0xb8] sm:$0xff]
        %v860 = vld [vmem:[#allocation11 + $0xc0] sm:$0xff]
        %v861 = vld [vmem:[#allocation11 + $0xc8] sm:$0xff]
        %v862 = vld [vmem:[#allocation11 + $0xd0] sm:$0xff]
        %v863 = vld [vmem:[#allocation11 + $0xd8] sm:$0xff]
        %v864 = vld [vmem:[#allocation11 + $0xe0] sm:$0xff]
        %v865 = vld [vmem:[#allocation11 + $0xe8] sm:$0xff]
        %v866 = vld [vmem:[#allocation11 + $0xf0] sm:$0xff]
        %v867 = vld [vmem:[#allocation11 + $0xf8] sm:$0xff]
        %868 = vmatpush.msra.mxu0 %v851
        %869 = vmatpush.msra.mxu0 %v850
        %870 = vmatpush.msra.mxu0 %v849
        %871 = vmatpush.msra.mxu0 %v848
        %872 = vmatpush.msra.mxu0 %v847
        %873 = vmatpush.msra.mxu0 %v846
        %874 = vmatpush.msra.mxu0 %v845
        %875 = vmatpush.msra.mxu0 %v844
        %876 = vmatpush.msra.mxu0 %v843
        %877 = vmatpush.msra.mxu0 %v842
        %878 = vmatpush.msra.mxu0 %v841
        %879 = vmatpush.msra.mxu0 %v840
        %880 = vmatpush.msra.mxu0 %v839
        %881 = vmatpush.msra.mxu0 %v838
        %882 = vmatpush.msra.mxu0 %v837
        %883 = vmatpush.msra.mxu0 %v836
        %884 = vmatmul.f32.gmra.mxu0 %v634
        %v885 = vpop.f32.mrf.mxu0
        %v886 = vadd.f32 0.0, %v885
        %887 = vdwg.mxu0
        %888 = vmatpush.msra.mxu0 %v867
        %889 = vmatpush.msra.mxu0 %v866
        %890 = vmatpush.msra.mxu0 %v865
        %891 = vmatpush.msra.mxu0 %v864
        %892 = vmatpush.msra.mxu0 %v863
        %893 = vmatpush.msra.mxu0 %v862
        %894 = vmatpush.msra.mxu0 %v861
        %895 = vmatpush.msra.mxu0 %v860
        %896 = vmatpush.msra.mxu0 %v859
        %897 = vmatpush.msra.mxu0 %v858
        %898 = vmatpush.msra.mxu0 %v857
        %899 = vmatpush.msra.mxu0 %v856
        %900 = vmatpush.msra.mxu0 %v855
        %901 = vmatpush.msra.mxu0 %v854
        %902 = vmatpush.msra.mxu0 %v853
        %903 = vmatpush.msra.mxu0 %v852
        %904 = vmatmul.f32.gmra.mxu0 %v674
        %v905 = vpop.f32.mrf.mxu0
        %v906 = vadd.f32 %v886, %v905
        %907 = vdwg.mxu0
        %908 = vmatpush.msra.mxu0 %v835
        %909 = vmatpush.msra.mxu0 %v834
        %910 = vmatpush.msra.mxu0 %v833
        %911 = vmatpush.msra.mxu0 %v832
        %912 = vmatpush.msra.mxu0 %v831
        %913 = vmatpush.msra.mxu0 %v830
        %914 = vmatpush.msra.mxu0 %v829
        %915 = vmatpush.msra.mxu0 %v828
        %916 = vmatpush.msra.mxu0 %v827
        %917 = vmatpush.msra.mxu0 %v826
        %918 = vmatpush.msra.mxu0 %v825
        %919 = vmatpush.msra.mxu0 %v824
        %920 = vmatpush.msra.mxu0 %v823
        %921 = vmatpush.msra.mxu0 %v822
        %922 = vmatpush.msra.mxu0 %v821
        %923 = vmatpush.msra.mxu0 %v820
        %924 = vmatmul.f32.gmra.mxu0 %v819
        %v925 = vpop.f32.mrf.mxu0
        %v926 = vadd.f32 %v906, %v925
        %927 = vdwg.mxu0
        %928 = vst [vmem:[%s433] sm:$0xff] %v926
        %s929 = sand.u32 %s231, 1
        %s930 = scalar_lea.sflag [#allocation4], %s929
        %s931 = sand.u32 %s231, 1
        %s932 = smul.addr %s931, 8
        %s933 = scalar_lea.vmem [#allocation13], %s932
        // Predicated region
        $region81: #{tpu_custom_call.1} parent=55 // pred_check
          %p934 = pneg %p241
        $region82: #{tpu_custom_call.1} parent=55 // pred_check_branch
          %936 = sbr.rel (%p934) target = $region84
        $region83: #{tpu_custom_call.1} parent=55 // pred_region
          %938 = vsyncadd %s930, 0
          %s939 = smul.addr %s29, 8
          %s940 = scalar_lea.hbm %s9, %s939
          %s942 = sshll.u32 %s933, 4
          %s943 = int_to_ptr.vmem [resolvable:$true] %s942
          %s944 = sshll.u32 %s940, 4
          %s945 = int_to_ptr.hbm [resolvable:$true] %s944
          %947 = dma.vmem_to_hbm [thread:$0]  %s943, 128, %s945, %s930
        $region84: #{tpu_custom_call.1} parent=55 // pred_fallthru
          _
      $region56: #{tpu_custom_call.1} parent=5 // pred_fallthru
        _
      %p948 = scmp.le.s32.totalorder 2, %s24
      // Predicated region
      $region85: #{tpu_custom_call.1} parent=5 // pred_check
        %p949 = pneg %p948
      $region86: #{tpu_custom_call.1} parent=5 // pred_check_branch
        %951 = sbr.rel (%p949) target = $region88
      $region87: #{tpu_custom_call.1} parent=5 // pred_region
        %s952 = ssub.s32 %s24, 2
        // Predicated region
        $region89: #{tpu_custom_call.1} parent=87 // pred_check
          %p953 = pneg %p247
        $region90: #{tpu_custom_call.1} parent=87 // pred_check_branch
          %955 = sbr.rel (%p953) target = $region92
        $region91: #{tpu_custom_call.1} parent=87 // pred_region
          %s956 = sand.u32 %s232, 1
          %s957 = scalar_lea.sflag [#allocation4], %s956
          %s958 = sand.u32 %s232, 1
          %s959 = smul.addr %s958, 8
          %s960 = scalar_lea.vmem [#allocation13], %s959
          %962 = dma.done %s957, 128
        $region92: #{tpu_custom_call.1} parent=87 // pred_fallthru
          _
      $region88: #{tpu_custom_call.1} parent=5 // pred_fallthru
        _
    $region6: #{tpu_custom_call.1} parent=1 // loop_footer
      %s28 = sadd.s32 1, %s24
    $region7: #{tpu_custom_call.1} parent=1 // loop_footer_branch
      %23 = sbr.rel target = $region3
    $region8: #{tpu_custom_call.1} parent=1 // loop_exit
      _
    %963 = vsyncpa [#allocation3], 1
    %s964 = scalar_lea.sflag [#allocation3], 1
    %965 = vsyncpa %s964, 1
    %966 = vsyncpa [#allocation6], 1
    %967 = vsyncpa [#allocation9], 1
    %968 = vsyncpa [#allocation12], 1
    %969 = vsyncpa [#allocation4], 1
    %s970 = scalar_lea.sflag [#allocation4], 1
    %971 = vsyncpa %s970, 1

</llo_original>
